<compile_context>
chip_gen: v5e
topology: v5e:2x2
jax: 0.10.0
libtpu: 0.0.40
codegen_flags: <defaults>
</compile_context>

<pallas_src>
import functools

import jax
import jax.numpy as jnp
from jax.experimental import pallas as pl
from jax.experimental.pallas import tpu as pltpu


def _round_up(x, m):
    return ((x + m - 1) // m) * m


def _mlp_kernel(x_ref, w1_ref, b1_ref, w2_ref, b2_ref, o_ref):
    # linear1 on the MXU: (TB, K) @ (K, 256), K sublane-padded to 8.
    h = jnp.dot(x_ref[...], w1_ref[...], preferred_element_type=jnp.float32)
    h = jnp.maximum(h + b1_ref[...], 0.0)
    # linear2 on the MXU: (TB, 256) @ (256, H).
    z0 = jnp.dot(h, w2_ref[...], preferred_element_type=jnp.float32) + b2_ref[...]
    o_ref[...] = z0.astype(o_ref.dtype)


@functools.partial(jax.jit, static_argnames=("tb",))
def initial_value_mlp(static, w1, b1, w2, b2, *, tb=256):
    """Fused linear1 -> relu -> linear2.

    static: (B, F_in)   f32
    w1:     (F_in, 256) f32   (transposed PyTorch layout)
    b1:     (1, 256)    f32
    w2:     (256, H)    f32
    b2:     (1, H)      f32
    returns z0: (B, H)  f32
    """
    B, F_in = static.shape
    HID = w1.shape[1]                      # 256
    H = w2.shape[1]

    # Sublane-align the linear1 contraction dim (7 -> 8): one zero column on x,
    # one zero row on w1.  Tiny arrays; keeps the x DMA and MXU K-axis layout clean.
    K = _round_up(F_in, 8)
    if K != F_in:
        static = jnp.pad(static, ((0, 0), (0, K - F_in)))
        w1 = jnp.pad(w1, ((0, K - F_in), (0, 0)))

    # Batch tiling: pick TB (multiple of 8, capped at `tb`) that minimizes padding,
    # and force >=2 grid steps once B >= 16 so both TensorCores run on v7x.
    # No wrapper-side batch pad: the partial last tile is masked by Pallas.
    min_tiles = 2 if B >= 16 else 1
    n_tiles = max(pl.cdiv(B, tb), min_tiles)
    TB = _round_up(pl.cdiv(B, n_tiles), 8)
    grid = (pl.cdiv(B, TB),)

    flops = 2 * B * (K * HID + HID * H)
    bytes_accessed = 4 * (B * K + K * HID + HID + HID * H + H + B * H)

    return pl.pallas_call(
        _mlp_kernel,
        out_shape=jax.ShapeDtypeStruct((B, H), jnp.float32),
        grid=grid,
        in_specs=[
            pl.BlockSpec((TB, K), lambda i: (i, 0)),     # activation stream
            pl.BlockSpec((K, HID), lambda i: (0, 0)),    # weights: VMEM-resident
            pl.BlockSpec((1, HID), lambda i: (0, 0)),
            pl.BlockSpec((HID, H), lambda i: (0, 0)),
            pl.BlockSpec((1, H), lambda i: (0, 0)),
        ],
        out_specs=pl.BlockSpec((TB, H), lambda i: (i, 0)),
        compiler_params=pltpu.CompilerParams(
            dimension_semantics=("parallel",),
        ),
        cost_estimate=pl.CostEstimate(
            flops=flops, transcendentals=0, bytes_accessed=bytes_accessed),
    )(static, w1, b1, w2, b2)


class InitialValueNetwork:
    """JAX/Pallas port of the PyTorch InitialValueNetwork."""

    def __init__(self, intensity, hidden_channels, model, key):
        in_features = 7 if intensity else 5
        k1, k2, k3, k4 = jax.random.split(key, 4)
        # torch.nn.Linear default init: uniform(-1/sqrt(fan_in), 1/sqrt(fan_in)).
        bound1 = 1.0 / jnp.sqrt(in_features)
        bound2 = 1.0 / jnp.sqrt(256.0)
        # Stored transposed relative to torch: (in, out).
        self.w1 = jax.random.uniform(k1, (in_features, 256), jnp.float32, -bound1, bound1)
        self.b1 = jax.random.uniform(k2, (1, 256), jnp.float32, -bound1, bound1)
        self.w2 = jax.random.uniform(k3, (256, hidden_channels), jnp.float32, -bound2, bound2)
        self.b2 = jax.random.uniform(k4, (1, hidden_channels), jnp.float32, -bound2, bound2)
        self.model = model

    def __call__(self, times, coeffs, final_index, **kwargs):
        *coeffs, static = coeffs
        z0 = initial_value_mlp(static, self.w1, self.b1, self.w2, self.b2)
        if self.model is not None:
            return self.model(times, coeffs, final_index, z0=z0, **kwargs)
        # TODO(synk): `self.model` is injected externally (e.g. NeuralCDE); without it
        # we return z0 directly.
        return z0


if __name__ == "__main__":
    key = jax.random.PRNGKey(0)
    k_params, k_static, k_coeffs, k_times = jax.random.split(key, 4)

    batch = 8
    seq = 8
    hidden_channels = 32
    intensity = True            # -> linear1 input features = 7
    in_features = 7

    net = InitialValueNetwork(intensity, hidden_channels, model=None, key=k_params)

    # Example inputs: times (seq,), a spline coeff tensor, and `static` last.
    times = jnp.linspace(0.0, 1.0, seq)
    c1 = jax.random.normal(k_coeffs, (batch, seq - 1, in_features), jnp.float32)
    static = jax.random.normal(k_static, (batch, in_features), jnp.float32)
    coeffs = (c1, static)
    final_index = jnp.full((batch,), seq - 1, jnp.int32)

    z0 = net(times, coeffs, final_index)
    z0 = jax.block_until_ready(z0)

    # Reference check in plain JAX (f32 everywhere).
    h_ref = jnp.maximum(static @ net.w1 + net.b1, 0.0)
    z0_ref = h_ref @ net.w2 + net.b2
    assert z0.shape == (batch, hidden_channels)
    assert jnp.allclose(z0, z0_ref, atol=1e-4, rtol=1e-4)

    # Also exercise a batch that is not a multiple of the tile (partial-tile path,
    # multi-step grid).
    static_big = jax.random.normal(k_times, (300, in_features), jnp.float32)
    z0_big = jax.block_until_ready(
        initial_value_mlp(static_big, net.w1, net.b1, net.w2, net.b2))
    z0_big_ref = jnp.maximum(static_big @ net.w1 + net.b1, 0.0) @ net.w2 + net.b2
    assert z0_big.shape == (300, hidden_channels)
    assert jnp.allclose(z0_big, z0_big_ref, atol=1e-4, rtol=1e-4)

    print("KERNEL_OK")
</pallas_src>

<mosaic_0001>
module attributes {stable_mosaic.version = 11 : i64} {
  func.func @_mlp_kernel(%arg0: i32, %arg1: memref<8x8xf32, #tpu.memory_space<vmem>>, %arg2: memref<8x256xf32, #tpu.memory_space<vmem>>, %arg3: memref<1x256xf32, #tpu.memory_space<vmem>>, %arg4: memref<256x32xf32, #tpu.memory_space<vmem>>, %arg5: memref<1x32xf32, #tpu.memory_space<vmem>>, %arg6: memref<8x32xf32, #tpu.memory_space<vmem>>) attributes {dimension_semantics = [#tpu.dimension_semantics<parallel>], iteration_bounds = array<i64: 1>, scalar_prefetch = 0 : i64, scratch_operands = 0 : i64, tpu.core_type = #tpu.core_type<tc>, window_params = [{transform_indices = @transform_0, window_bounds = array<i64: 8, 8>}, {pipeline_mode = #tpu.pipeline_mode<synchronous>, transform_indices = @transform_1, window_bounds = array<i64: 8, 256>}, {pipeline_mode = #tpu.pipeline_mode<synchronous>, transform_indices = @transform_2, window_bounds = array<i64: 1, 256>}, {pipeline_mode = #tpu.pipeline_mode<synchronous>, transform_indices = @transform_3, window_bounds = array<i64: 256, 32>}, {pipeline_mode = #tpu.pipeline_mode<synchronous>, transform_indices = @transform_4, window_bounds = array<i64: 1, 32>}, {transform_indices = @transform_5, window_bounds = array<i64: 8, 32>}]} {
    %c0 = arith.constant 0 : index
    %c0_0 = arith.constant 0 : index
    %0 = vector.load %arg1[%c0, %c0_0] : memref<8x8xf32, #tpu.memory_space<vmem>>, vector<8x8xf32>
    %c0_1 = arith.constant 0 : index
    %c0_2 = arith.constant 0 : index
    %1 = vector.load %arg2[%c0_1, %c0_2] : memref<8x256xf32, #tpu.memory_space<vmem>>, vector<8x256xf32>
    %cst = arith.constant dense<0.000000e+00> : vector<8x256xf32>
    %2 = tpu.matmul %0, %1, %cst {dimension_numbers = #tpu.dot_dimension_numbers<[1], [0], [0], [1], [0, 0, 1, 1], [], []>} : vector<8x8xf32>, vector<8x256xf32>, vector<8x256xf32> -> vector<8x256xf32>
    %c0_3 = arith.constant 0 : index
    %c0_4 = arith.constant 0 : index
    %3 = vector.load %arg3[%c0_3, %c0_4] : memref<1x256xf32, #tpu.memory_space<vmem>>, vector<1x256xf32>
    %4 = vector.broadcast %3 : vector<1x256xf32> to vector<8x256xf32>
    %5 = arith.addf %2, %4 : vector<8x256xf32>
    %cst_5 = arith.constant 0.000000e+00 : f32
    %6 = vector.broadcast %cst_5 : f32 to vector<8x256xf32>
    %7 = arith.maximumf %5, %6 : vector<8x256xf32>
    %c0_6 = arith.constant 0 : index
    %c0_7 = arith.constant 0 : index
    %8 = vector.load %arg4[%c0_6, %c0_7] : memref<256x32xf32, #tpu.memory_space<vmem>>, vector<256x32xf32>
    %cst_8 = arith.constant dense<0.000000e+00> : vector<8x32xf32>
    %9 = tpu.matmul %7, %8, %cst_8 {dimension_numbers = #tpu.dot_dimension_numbers<[1], [0], [0], [1], [0, 0, 1, 1], [], []>} : vector<8x256xf32>, vector<256x32xf32>, vector<8x32xf32> -> vector<8x32xf32>
    %c0_9 = arith.constant 0 : index
    %c0_10 = arith.constant 0 : index
    %10 = vector.load %arg5[%c0_9, %c0_10] : memref<1x32xf32, #tpu.memory_space<vmem>>, vector<1x32xf32>
    %11 = vector.broadcast %10 : vector<1x32xf32> to vector<8x32xf32>
    %12 = arith.addf %9, %11 : vector<8x32xf32>
    %c0_11 = arith.constant 0 : index
    %c0_12 = arith.constant 0 : index
    %13 = vector.load %arg6[%c0_11, %c0_12] : memref<8x32xf32, #tpu.memory_space<vmem>>, vector<8x32xf32>
    tpu.vector_store %arg6[%c0_11, %c0_12], %12 {strides = array<i32>} : memref<8x32xf32, #tpu.memory_space<vmem>>, vector<8x32xf32>,
    return
  }
  func.func @transform_0(%arg0: i32) -> (i32, i32) {
    %c0_i32 = arith.constant 0 : i32
    %c0_i32_0 = arith.constant 0 : i32
    return %arg0, %c0_i32 : i32, i32
  }
  func.func @transform_1(%arg0: i32) -> (i32, i32) {
    %c0_i32 = arith.constant 0 : i32
    %c0_i32_0 = arith.constant 0 : i32
    %c0_i32_1 = arith.constant 0 : i32
    return %c0_i32, %c0_i32_0 : i32, i32
  }
  func.func @transform_2(%arg0: i32) -> (i32, i32) {
    %c0_i32 = arith.constant 0 : i32
    %c0_i32_0 = arith.constant 0 : i32
    %c0_i32_1 = arith.constant 0 : i32
    return %c0_i32, %c0_i32_0 : i32, i32
  }
  func.func @transform_3(%arg0: i32) -> (i32, i32) {
    %c0_i32 = arith.constant 0 : i32
    %c0_i32_0 = arith.constant 0 : i32
    %c0_i32_1 = arith.constant 0 : i32
    return %c0_i32, %c0_i32_0 : i32, i32
  }
  func.func @transform_4(%arg0: i32) -> (i32, i32) {
    %c0_i32 = arith.constant 0 : i32
    %c0_i32_0 = arith.constant 0 : i32
    %c0_i32_1 = arith.constant 0 : i32
    return %c0_i32, %c0_i32_0 : i32, i32
  }
  func.func @transform_5(%arg0: i32) -> (i32, i32) {
    %c0_i32 = arith.constant 0 : i32
    %c0_i32_0 = arith.constant 0 : i32
    return %arg0, %c0_i32 : i32, i32
  }
}

</mosaic_0001>

<llo_original>
// kernel: initial_value_mlp.1
$region0: #{initial_value_mlp.1}
  #allocation0 [shape = 'u32[]', space=smem, size = 0x4, offset = 0x4, fixed_abs, tag = 'smem constant byte address 0x4 - core index']
  #allocation1 [shape = 'u32[72,128]{1,0:T(1,128)}', space=vmem, size = 0x9000, scoped, tag = 'internal scratch']
  %s0 = inlined_call_operand.vmem [shape: f32[8,8], index: 0, kind: input, shape index: {}]
  %s1 = inlined_call_operand.vmem [shape: f32[8,256], index: 1, kind: input, shape index: {}]
  %s2 = inlined_call_operand.vmem [shape: f32[1,256], index: 2, kind: input, shape index: {}]
  %s3 = inlined_call_operand.vmem [shape: f32[256,32], index: 3, kind: input, shape index: {}]
  %s4 = inlined_call_operand.vmem [shape: f32[1,32], index: 4, kind: input, shape index: {}]
  %s5 = inlined_call_operand.hbm [shape: f32[8,32], index: 5, kind: output, shape index: {}]
  %s6 = sld [smem:[#allocation0]]
  $region30: #{initial_value_mlp.1} parent=0
    _
  %s8 = ssub.s32 1, %s6
  %s9 = scalar_select 0, %s8, %s6
  $region1: #{initial_value_mlp.1} parent=0
    #allocation2 [shape = 'u8[4096]{0}', space=vmem, size = 0x1000, scoped, tag = 'output window, operand 0, single buffered']
    #allocation3 [shape = 's32[1]{0}', space=sflag, size = 0x4, scoped, tag = 'scoped memory for initial_value_mlp.1']
    %10 = vsyncpa [#allocation3], 0
    // Predicated region
    $region2: #{initial_value_mlp.1} parent=1 // pred_check
      _
    $region3: #{initial_value_mlp.1} parent=1 // pred_check_branch
      %12 = sbr.rel (0) target = $region5
    $region4: #{initial_value_mlp.1} parent=1 // pred_region
      _
    $region5: #{initial_value_mlp.1} parent=1 // pred_fallthru
      _
    // Predicated region
    $region6: #{initial_value_mlp.1} parent=1 // pred_check
      _
    $region7: #{initial_value_mlp.1} parent=1 // pred_check_branch
      %14 = sbr.rel (0) target = $region9
    $region8: #{initial_value_mlp.1} parent=1 // pred_region
      _
    $region9: #{initial_value_mlp.1} parent=1 // pred_fallthru
      _
    // Predicated region
    $region10: #{initial_value_mlp.1} parent=1 // pred_check
      _
    $region11: #{initial_value_mlp.1} parent=1 // pred_check_branch
      %16 = sbr.rel (0) target = $region13
    $region12: #{initial_value_mlp.1} parent=1 // pred_region
      _
    $region13: #{initial_value_mlp.1} parent=1 // pred_fallthru
      _
    // Predicated region
    $region14: #{initial_value_mlp.1} parent=1 // pred_check
      _
    $region15: #{initial_value_mlp.1} parent=1 // pred_check_branch
      %18 = sbr.rel (0) target = $region17
    $region16: #{initial_value_mlp.1} parent=1 // pred_region
      _
    $region17: #{initial_value_mlp.1} parent=1 // pred_fallthru
      _
    // Predicated region
    $region18: #{initial_value_mlp.1} parent=1 // pred_check
      _
    $region19: #{initial_value_mlp.1} parent=1 // pred_check_branch
      %20 = sbr.rel (0) target = $region21
    $region20: #{initial_value_mlp.1} parent=1 // pred_region
      _
    $region21: #{initial_value_mlp.1} parent=1 // pred_fallthru
      _
    %v21 = vld [vmem:[%s0] sm:$0xff]
    %v22 = vld [vmem:[%s1] sm:$0xff]
    %v23 = vld [vmem:[%s1 + $0x8] sm:$0xff]
    %v24 = vld [vmem:[%s2] sm:$0x3]
    %v26 = vperm.slane %v24, 0
    %v27 = vperm.slane %v24, 1
    %vm30 = vcmask 64512
    %v32 = vsel %vm30, %v21, 0
    %34 = vmatpush.msra.mxu0 0.0
    %35 = vmatpush.msra.mxu0 0.0
    %36 = vmatpush.msra.mxu0 0.0
    %37 = vmatpush.msra.mxu0 0.0
    %38 = vmatpush.msra.mxu0 0.0
    %39 = vmatpush.msra.mxu0 0.0
    %40 = vmatpush.msra.mxu0 0.0
    %41 = vmatpush.msra.mxu0 0.0
    %42 = vmatpush.msra.mxu0 0.0
    %43 = vmatpush.msra.mxu0 0.0
    %44 = vmatpush.msra.mxu0 0.0
    %45 = vmatpush.msra.mxu0 0.0
    %46 = vmatpush.msra.mxu0 0.0
    %47 = vmatpush.msra.mxu0 0.0
    %48 = vmatpush.msra.mxu0 0.0
    %49 = vmatpush.msra.mxu0 %v22
    %50 = vmatmul.f32.gmra.mxu0 %v32
    %v51 = vpop.f32.mrf.mxu0
    %v52 = vadd.f32 %v26, %v51
    %53 = vdwg.mxu0
    %54 = vmatpush.msra.mxu0 0.0
    %55 = vmatpush.msra.mxu0 0.0
    %56 = vmatpush.msra.mxu0 0.0
    %57 = vmatpush.msra.mxu0 0.0
    %58 = vmatpush.msra.mxu0 0.0
    %59 = vmatpush.msra.mxu0 0.0
    %60 = vmatpush.msra.mxu0 0.0
    %61 = vmatpush.msra.mxu0 0.0
    %62 = vmatpush.msra.mxu0 0.0
    %63 = vmatpush.msra.mxu0 0.0
    %64 = vmatpush.msra.mxu0 0.0
    %65 = vmatpush.msra.mxu0 0.0
    %66 = vmatpush.msra.mxu0 0.0
    %67 = vmatpush.msra.mxu0 0.0
    %68 = vmatpush.msra.mxu0 0.0
    %69 = vmatpush.msra.mxu0 %v23
    %70 = vmatmul.f32.gmra.mxu0 %v32
    %v71 = vpop.f32.mrf.mxu0
    %v72 = vadd.f32 %v27, %v71
    %73 = vdwg.mxu0
    %v74 = vmax.f32 %v52, 0.0
    %v75 = vmax.f32 %v72, 0.0
    %v76 = vld [vmem:[%s3] sm:$0xff]
    %v77 = vld [vmem:[%s3 + $0x8] sm:$0xff]
    %v78 = vld [vmem:[%s3 + $0x10] sm:$0xff]
    %v79 = vld [vmem:[%s3 + $0x18] sm:$0xff]
    %v80 = vld [vmem:[%s3 + $0x20] sm:$0xff]
    %v81 = vld [vmem:[%s3 + $0x28] sm:$0xff]
    %v82 = vld [vmem:[%s3 + $0x30] sm:$0xff]
    %v83 = vld [vmem:[%s3 + $0x38] sm:$0xff]
    %v84 = vld [vmem:[%s3 + $0x40] sm:$0xff]
    %v85 = vld [vmem:[%s3 + $0x48] sm:$0xff]
    %v86 = vld [vmem:[%s3 + $0x50] sm:$0xff]
    %v87 = vld [vmem:[%s3 + $0x58] sm:$0xff]
    %v88 = vld [vmem:[%s3 + $0x60] sm:$0xff]
    %v89 = vld [vmem:[%s3 + $0x68] sm:$0xff]
    %v90 = vld [vmem:[%s3 + $0x70] sm:$0xff]
    %v91 = vld [vmem:[%s3 + $0x78] sm:$0xff]
    %v92 = vld [vmem:[%s3 + $0x80] sm:$0xff]
    %v93 = vld [vmem:[%s3 + $0x88] sm:$0xff]
    %v94 = vld [vmem:[%s3 + $0x90] sm:$0xff]
    %v95 = vld [vmem:[%s3 + $0x98] sm:$0xff]
    %v96 = vld [vmem:[%s3 + $0xa0] sm:$0xff]
    %v97 = vld [vmem:[%s3 + $0xa8] sm:$0xff]
    %v98 = vld [vmem:[%s3 + $0xb0] sm:$0xff]
    %v99 = vld [vmem:[%s3 + $0xb8] sm:$0xff]
    %v100 = vld [vmem:[%s3 + $0xc0] sm:$0xff]
    %v101 = vld [vmem:[%s3 + $0xc8] sm:$0xff]
    %v102 = vld [vmem:[%s3 + $0xd0] sm:$0xff]
    %v103 = vld [vmem:[%s3 + $0xd8] sm:$0xff]
    %v104 = vld [vmem:[%s3 + $0xe0] sm:$0xff]
    %v105 = vld [vmem:[%s3 + $0xe8] sm:$0xff]
    %v106 = vld [vmem:[%s3 + $0xf0] sm:$0xff]
    %v107 = vld [vmem:[%s3 + $0xf8] sm:$0xff]
    %v108 = vld [vmem:[%s4] sm:$0x1]
    %v110 = vperm.slane %v108, 0
    %112 = vmatpush.msra.mxu0 %v91
    %113 = vmatpush.msra.mxu0 %v90
    %114 = vmatpush.msra.mxu0 %v89
    %115 = vmatpush.msra.mxu0 %v88
    %116 = vmatpush.msra.mxu0 %v87
    %117 = vmatpush.msra.mxu0 %v86
    %118 = vmatpush.msra.mxu0 %v85
    %119 = vmatpush.msra.mxu0 %v84
    %120 = vmatpush.msra.mxu0 %v83
    %121 = vmatpush.msra.mxu0 %v82
    %122 = vmatpush.msra.mxu0 %v81
    %123 = vmatpush.msra.mxu0 %v80
    %124 = vmatpush.msra.mxu0 %v79
    %125 = vmatpush.msra.mxu0 %v78
    %126 = vmatpush.msra.mxu0 %v77
    %127 = vmatpush.msra.mxu0 %v76
    %128 = vmatmul.f32.gmra.mxu0 %v74
    %v129 = vpop.f32.mrf.mxu0
    %v130 = vadd.f32 %v110, %v129
    %131 = vdwg.mxu0
    %132 = vmatpush.msra.mxu0 %v107
    %133 = vmatpush.msra.mxu0 %v106
    %134 = vmatpush.msra.mxu0 %v105
    %135 = vmatpush.msra.mxu0 %v104
    %136 = vmatpush.msra.mxu0 %v103
    %137 = vmatpush.msra.mxu0 %v102
    %138 = vmatpush.msra.mxu0 %v101
    %139 = vmatpush.msra.mxu0 %v100
    %140 = vmatpush.msra.mxu0 %v99
    %141 = vmatpush.msra.mxu0 %v98
    %142 = vmatpush.msra.mxu0 %v97
    %143 = vmatpush.msra.mxu0 %v96
    %144 = vmatpush.msra.mxu0 %v95
    %145 = vmatpush.msra.mxu0 %v94
    %146 = vmatpush.msra.mxu0 %v93
    %147 = vmatpush.msra.mxu0 %v92
    %148 = vmatmul.f32.gmra.mxu0 %v75
    %v149 = vpop.f32.mrf.mxu0
    %v150 = vadd.f32 %v130, %v149
    %151 = vdwg.mxu0
    %vm152 = vcmask 261120
    %153 = vst.msk [vmem:[#allocation2] sm:$0xff] %vm152, %v150
    // Predicated region
    $region22: #{initial_value_mlp.1} parent=1 // pred_check
      _
    $region23: #{initial_value_mlp.1} parent=1 // pred_check_branch
      %155 = sbr.rel (0) target = $region25
    $region24: #{initial_value_mlp.1} parent=1 // pred_region
      %157 = vsyncadd [#allocation3], 0
      %s159 = sshll.u32 [#allocation2], 4
      %s160 = int_to_ptr.vmem [resolvable:$true] %s159
      %s161 = sshll.u32 %s5, 4
      %s162 = int_to_ptr.hbm [resolvable:$true] %s161
      %164 = dma.vmem_to_hbm [thread:$0]  %s160, 128, %s162, [#allocation3]
    $region25: #{initial_value_mlp.1} parent=1 // pred_fallthru
      _
    // Predicated region
    $region26: #{initial_value_mlp.1} parent=1 // pred_check
      _
    $region27: #{initial_value_mlp.1} parent=1 // pred_check_branch
      %166 = sbr.rel (0) target = $region29
    $region28: #{initial_value_mlp.1} parent=1 // pred_region
      %168 = dma.done [#allocation3], 128
    $region29: #{initial_value_mlp.1} parent=1 // pred_fallthru
      _
    %169 = vsyncpa [#allocation3], 1

</llo_original>
